<compile_context>
chip_gen: v5e
topology: v5e:2x2
jax: 0.10.0
libtpu: 0.0.40
codegen_flags: <defaults>
</compile_context>

<pallas_src>
import math

import jax
import jax.numpy as jnp
import numpy as np
from jax import lax
from jax.experimental import pallas as pl
from jax.experimental.pallas import tpu as pltpu

# ----------------------------- config ---------------------------------------
HIDDEN = 32        # config.hidden_size
INNER = 64         # config.inner_hidden_size
HEADS = 4          # config.num_attention_heads
HEAD_DIM = HIDDEN // HEADS
ATTN_SPAN = 16     # config.attn_span (== cache + seq here)
RAMP = 4           # config.adapt_span_ramp
SPAN_INIT = 0.25   # config.adapt_span_init
BATCH = 1          # reference AdaptiveMask broadcast requires B==1 (see TODO above)
SEQ = 8            # query length M
CACHE = 8          # h_cache length
LN_EPS = 1e-5


# ----------------------------- kernel ---------------------------------------
def _layer_kernel(hall_ref, wq_ref, wk_ref, wv_ref, wo_ref, w1_ref, w2_ref,
                  lnb_ref, b1_ref, mask_ref, out_ref):
    L = hall_ref.shape[1]
    M = out_ref.shape[1]
    H = out_ref.shape[2]
    C = L - M                          # cache length (static)
    K = mask_ref.shape[0]              # heads

    xa = hall_ref[0]                   # (L, H) f32  cache + current
    x = xa[C:, :]                      # (M, H) f32  current queries (sublane-tile aligned)
    hb = xa.astype(jnp.bfloat16)       # (L, H) bf16
    xb = x.astype(jnp.bfloat16)        # (M, H) bf16

    # --- head-batched Q/K/V projections (batch axis = heads, contraction over H) ---
    xk = jnp.broadcast_to(xb[None], (K, M, H))
    hk = jnp.broadcast_to(hb[None], (K, L, H))
    q = jnp.einsum('kmh,khd->kmd', xk, wq_ref[...],
                   preferred_element_type=jnp.float32)             # (K, M, D)
    k = jnp.einsum('klh,khd->kld', hk, wk_ref[...],
                   preferred_element_type=jnp.float32)             # (K, L, D)
    v = jnp.einsum('klh,khd->kld', hk, wv_ref[...],
                   preferred_element_type=jnp.float32)             # (K, L, D)

    # --- stacked-head attention: ONE softmax pass over (K, M, L), f32 scaling ---
    s = jnp.einsum('kmd,kld->kml', q.astype(jnp.bfloat16), k.astype(jnp.bfloat16),
                   preferred_element_type=jnp.float32) * (1.0 / math.sqrt(H))
    s = s - jnp.max(s, axis=-1, keepdims=True)
    p = jnp.exp(s)
    p = p * pl.reciprocal(jnp.sum(p, axis=-1, keepdims=True), approx=True)
    p = p * mask_ref[...]              # post-softmax adaptive-span mask (pre-broadcast)

    o = jnp.einsum('kml,kld->kmd', p.astype(jnp.bfloat16), v.astype(jnp.bfloat16),
                   preferred_element_type=jnp.float32)             # (K, M, D)
    # per-head output projection, summed over heads (replaces the lane-axis concat)
    attn_out = jnp.sum(
        jnp.einsum('kmd,kdh->kmh', o.astype(jnp.bfloat16), wo_ref[...],
                   preferred_element_type=jnp.float32), axis=0)    # (M, H)

    # --- residual + LayerNorm 1 (f32); ln vectors arrive pre-broadcast to (M, H) ---
    h1 = x + attn_out
    mu1 = jnp.mean(h1, axis=-1, keepdims=True)
    var1 = jnp.mean((h1 - mu1) ** 2, axis=-1, keepdims=True)
    hn = (h1 - mu1) * lax.rsqrt(var1 + LN_EPS) * lnb_ref[0] + lnb_ref[1]

    # --- feed-forward (dropout is identity in eval mode) ---
    f = jnp.maximum(
        jnp.dot(hn.astype(jnp.bfloat16), w1_ref[...],
                preferred_element_type=jnp.float32) + b1_ref[...], 0.0)   # (M, INNER)
    f2 = jnp.dot(f.astype(jnp.bfloat16), w2_ref[...],
                 preferred_element_type=jnp.float32) + lnb_ref[2]         # (M, H) (+ b2)

    # --- residual + LayerNorm 2 ---
    h2 = hn + f2
    mu2 = jnp.mean(h2, axis=-1, keepdims=True)
    var2 = jnp.mean((h2 - mu2) ** 2, axis=-1, keepdims=True)
    out_ref[0] = (h2 - mu2) * lax.rsqrt(var2 + LN_EPS) * lnb_ref[3] + lnb_ref[4]


# ----------------------------- wrapper ---------------------------------------
def transformer_seq_layer(h, h_cache, key_pe, params):
    """h: (B, M, H); h_cache: (B, C, H); key_pe: unused (see TODO above)."""
    del key_pe
    B, M, H = h.shape
    K, D = HEADS, HEAD_DIM
    h_all = jnp.concatenate([h_cache, h], axis=1)           # glue; h == h_all[:, -M:]
    L = h_all.shape[1]

    # adaptive-span mask (parameter-only math), pre-broadcast to (K, M, L)
    mask_template = jnp.linspace(1.0 - ATTN_SPAN, 0.0, ATTN_SPAN, dtype=jnp.float32)
    mask = mask_template[None, None, :] + params["span_val"] * ATTN_SPAN   # (K,1,span)
    mask = jnp.clip(mask / RAMP + 1.0, 0.0, 1.0)
    if L < ATTN_SPAN:
        mask = mask[:, :, -L:]
    mask = jnp.broadcast_to(mask, (K, M, L)).astype(jnp.float32)

    # per-head weight slabs; nn.Linear computes y = x @ W.T
    def per_head_in(W):                                      # (H, H) -> (K, H, D)
        return jnp.transpose(W.T.reshape(H, K, D), (1, 0, 2)).astype(jnp.bfloat16)

    wq = per_head_in(params["Wq"])                           # (K, H, D)
    wk = per_head_in(params["Wk"])
    wv = per_head_in(params["Wv"])
    wo = params["Wo"].T.reshape(K, D, H).astype(jnp.bfloat16)  # (K, D, H)
    w1 = params["W1"].T.astype(jnp.bfloat16)                   # (H, INNER)
    w2 = params["W2"].T.astype(jnp.bfloat16)                   # (INNER, H)

    # LayerNorm / bias vectors pre-broadcast so kernel reads are plain (M, H) tiles
    lnb = jnp.stack([
        jnp.broadcast_to(params["ln1_w"], (M, H)),
        jnp.broadcast_to(params["ln1_b"], (M, H)),
        jnp.broadcast_to(params["b2"], (M, H)),
        jnp.broadcast_to(params["ln2_w"], (M, H)),
        jnp.broadcast_to(params["ln2_b"], (M, H)),
    ]).astype(jnp.float32)                                     # (5, M, H)
    b1 = jnp.broadcast_to(params["b1"], (M, INNER)).astype(jnp.float32)

    return pl.pallas_call(
        _layer_kernel,
        out_shape=jax.ShapeDtypeStruct((B, M, H), jnp.float32),
        grid=(B,),
        in_specs=[
            pl.BlockSpec((1, L, H), lambda b: (b, 0, 0)),        # h_all (contains h)
            pl.BlockSpec((K, H, D), lambda b: (0, 0, 0)),        # Wq per head
            pl.BlockSpec((K, H, D), lambda b: (0, 0, 0)),        # Wk per head
            pl.BlockSpec((K, H, D), lambda b: (0, 0, 0)),        # Wv per head
            pl.BlockSpec((K, D, H), lambda b: (0, 0, 0)),        # Wo per head
            pl.BlockSpec((H, INNER), lambda b: (0, 0)),          # W1
            pl.BlockSpec((INNER, H), lambda b: (0, 0)),          # W2
            pl.BlockSpec((5, M, H), lambda b: (0, 0, 0)),        # ln1 w/b, b2, ln2 w/b
            pl.BlockSpec((M, INNER), lambda b: (0, 0)),          # b1
            pl.BlockSpec((K, M, L), lambda b: (0, 0, 0)),        # adaptive mask
        ],
        out_specs=pl.BlockSpec((1, M, H), lambda b: (b, 0, 0)),
        compiler_params=pltpu.CompilerParams(dimension_semantics=("parallel",)),
    )(h_all, wq, wk, wv, wo, w1, w2, lnb, b1, mask)


# ----------------------------- pure-JAX reference -----------------------------
def reference(h, h_cache, params):
    B, M, H = h.shape
    K, D = HEADS, HEAD_DIM
    h_all = jnp.concatenate([h_cache, h], axis=1)
    L = h_all.shape[1]

    def head_reshape(x):
        b = x.shape[0]
        return x.reshape(b, -1, K, D).transpose(0, 2, 1, 3).reshape(b * K, -1, D)

    q = head_reshape(h @ params["Wq"].T)
    k = head_reshape(h_all @ params["Wk"].T)
    v = head_reshape(h_all @ params["Wv"].T)

    s = (q @ jnp.swapaxes(k, -1, -2)) / math.sqrt(H)
    attn = jax.nn.softmax(s, axis=-1)

    mask_template = jnp.linspace(1.0 - ATTN_SPAN, 0.0, ATTN_SPAN, dtype=jnp.float32)
    mask = mask_template[None, None, :] + params["span_val"] * ATTN_SPAN
    mask = jnp.clip(mask / RAMP + 1.0, 0.0, 1.0)
    if L < ATTN_SPAN:
        mask = mask[:, :, -L:]
    attn = attn * mask                                       # (B*K, M, L) * (K, 1, L), B==1

    out = attn @ v
    out = out.reshape(B, K, M, D).transpose(0, 2, 1, 3).reshape(B, M, H)
    out = out @ params["Wo"].T

    def ln(x, w, b):
        mu = jnp.mean(x, axis=-1, keepdims=True)
        var = jnp.mean((x - mu) ** 2, axis=-1, keepdims=True)
        return (x - mu) / jnp.sqrt(var + LN_EPS) * w + b

    h1 = ln(h + out, params["ln1_w"], params["ln1_b"])
    f = jax.nn.relu(h1 @ params["W1"].T + params["b1"])
    f2 = f @ params["W2"].T + params["b2"]
    return ln(h1 + f2, params["ln2_w"], params["ln2_b"])


# ----------------------------- main ------------------------------------------
if __name__ == "__main__":
    key = jax.random.PRNGKey(0)
    ks = jax.random.split(key, 12)

    params = {
        "Wq": 0.1 * jax.random.normal(ks[0], (HIDDEN, HIDDEN), jnp.float32),
        "Wk": 0.1 * jax.random.normal(ks[1], (HIDDEN, HIDDEN), jnp.float32),
        "Wv": 0.1 * jax.random.normal(ks[2], (HIDDEN, HIDDEN), jnp.float32),
        "Wo": 0.1 * jax.random.normal(ks[3], (HIDDEN, HIDDEN), jnp.float32),
        "W1": 0.1 * jax.random.normal(ks[4], (INNER, HIDDEN), jnp.float32),
        "b1": 0.05 * jax.random.normal(ks[5], (INNER,), jnp.float32),
        "W2": 0.1 * jax.random.normal(ks[6], (HIDDEN, INNER), jnp.float32),
        "b2": 0.05 * jax.random.normal(ks[7], (HIDDEN,), jnp.float32),
        "ln1_w": jnp.ones((HIDDEN,), jnp.float32),
        "ln1_b": jnp.zeros((HIDDEN,), jnp.float32),
        "ln2_w": jnp.ones((HIDDEN,), jnp.float32),
        "ln2_b": jnp.zeros((HIDDEN,), jnp.float32),
        "span_val": jnp.full((HEADS, 1, 1), SPAN_INIT, jnp.float32),   # AdaptiveMask.current_val
    }

    h = jax.random.normal(ks[8], (BATCH, SEQ, HIDDEN), jnp.float32)
    h_cache = jax.random.normal(ks[9], (BATCH, CACHE, HIDDEN), jnp.float32)
    key_pe = jax.random.normal(ks[10], (1, ATTN_SPAN, HIDDEN), jnp.float32)  # unused (see TODO)

    out = jax.jit(lambda a, b, c: transformer_seq_layer(a, b, c, params))(h, h_cache, key_pe)
    out = jax.block_until_ready(out)

    ref = reference(h, h_cache, params)
    assert out.shape == (BATCH, SEQ, HIDDEN)
    assert bool(jnp.all(jnp.isfinite(out)))
    assert np.allclose(np.asarray(out), np.asarray(ref), atol=5e-2, rtol=5e-2), (
        f"max abs diff {np.max(np.abs(np.asarray(out) - np.asarray(ref)))}")
    print("KERNEL_OK")
</pallas_src>

<mosaic_0001>
module attributes {stable_mosaic.version = 11 : i64} {
  func.func @_layer_kernel(%arg0: i32, %arg1: memref<1x16x32xf32, #tpu.memory_space<vmem>>, %arg2: memref<4x32x8xbf16, #tpu.memory_space<vmem>>, %arg3: memref<4x32x8xbf16, #tpu.memory_space<vmem>>, %arg4: memref<4x32x8xbf16, #tpu.memory_space<vmem>>, %arg5: memref<4x8x32xbf16, #tpu.memory_space<vmem>>, %arg6: memref<32x64xbf16, #tpu.memory_space<vmem>>, %arg7: memref<64x32xbf16, #tpu.memory_space<vmem>>, %arg8: memref<5x8x32xf32, #tpu.memory_space<vmem>>, %arg9: memref<8x64xf32, #tpu.memory_space<vmem>>, %arg10: memref<4x8x16xf32, #tpu.memory_space<vmem>>, %arg11: memref<1x8x32xf32, #tpu.memory_space<vmem>>) attributes {dimension_semantics = [#tpu.dimension_semantics<parallel>], iteration_bounds = array<i64: 1>, scalar_prefetch = 0 : i64, scratch_operands = 0 : i64, tpu.core_type = #tpu.core_type<tc>, window_params = [{transform_indices = @transform_0, window_bounds = array<i64: 1, 16, 32>}, {pipeline_mode = #tpu.pipeline_mode<synchronous>, transform_indices = @transform_1, window_bounds = array<i64: 4, 32, 8>}, {pipeline_mode = #tpu.pipeline_mode<synchronous>, transform_indices = @transform_2, window_bounds = array<i64: 4, 32, 8>}, {pipeline_mode = #tpu.pipeline_mode<synchronous>, transform_indices = @transform_3, window_bounds = array<i64: 4, 32, 8>}, {pipeline_mode = #tpu.pipeline_mode<synchronous>, transform_indices = @transform_4, window_bounds = array<i64: 4, 8, 32>}, {pipeline_mode = #tpu.pipeline_mode<synchronous>, transform_indices = @transform_5, window_bounds = array<i64: 32, 64>}, {pipeline_mode = #tpu.pipeline_mode<synchronous>, transform_indices = @transform_6, window_bounds = array<i64: 64, 32>}, {pipeline_mode = #tpu.pipeline_mode<synchronous>, transform_indices = @transform_7, window_bounds = array<i64: 5, 8, 32>}, {pipeline_mode = #tpu.pipeline_mode<synchronous>, transform_indices = @transform_8, window_bounds = array<i64: 8, 64>}, {pipeline_mode = #tpu.pipeline_mode<synchronous>, transform_indices = @transform_9, window_bounds = array<i64: 4, 8, 16>}, {transform_indices = @transform_10, window_bounds = array<i64: 1, 8, 32>}]} {
    %c0 = arith.constant 0 : index
    %c0_0 = arith.constant 0 : index
    %c0_1 = arith.constant 0 : index
    %0 = vector.load %arg1[%c0, %c0_0, %c0_1] : memref<1x16x32xf32, #tpu.memory_space<vmem>>, vector<1x16x32xf32>
    %1 = vector.shape_cast %0 : vector<1x16x32xf32> to vector<16x32xf32>
    %2 = vector.extract_strided_slice %1 {offsets = [8, 0], sizes = [8, 32], strides = [1, 1]} : vector<16x32xf32> to vector<8x32xf32>
    %3 = arith.truncf %1 : vector<16x32xf32> to vector<16x32xbf16>
    %4 = arith.truncf %2 : vector<8x32xf32> to vector<8x32xbf16>
    %5 = vector.shape_cast %4 : vector<8x32xbf16> to vector<1x8x32xbf16>
    %6 = vector.shape_cast %5 : vector<1x8x32xbf16> to vector<1x8x32xbf16>
    %7 = vector.broadcast %6 : vector<1x8x32xbf16> to vector<4x8x32xbf16>
    %8 = vector.shape_cast %3 : vector<16x32xbf16> to vector<1x16x32xbf16>
    %9 = vector.shape_cast %8 : vector<1x16x32xbf16> to vector<1x16x32xbf16>
    %10 = vector.broadcast %9 : vector<1x16x32xbf16> to vector<4x16x32xbf16>
    %c0_2 = arith.constant 0 : index
    %c0_3 = arith.constant 0 : index
    %c0_4 = arith.constant 0 : index
    %11 = vector.load %arg2[%c0_2, %c0_3, %c0_4] : memref<4x32x8xbf16, #tpu.memory_space<vmem>>, vector<4x32x8xbf16>
    "tpu.trace_start"() <{level = 10 : i32, message = "kmh,khd->kmd"}> : () -> ()
    %cst = arith.constant dense<0.000000e+00> : vector<4x8x8xf32>
    %12 = tpu.matmul %7, %11, %cst {dimension_numbers = #tpu.dot_dimension_numbers<[2], [1], [1], [2], [0, 0, 0, 1, 1, 2], [0], [0]>} : vector<4x8x32xbf16>, vector<4x32x8xbf16>, vector<4x8x8xf32> -> vector<4x8x8xf32>
    "tpu.trace_stop"() : () -> ()
    %c0_5 = arith.constant 0 : index
    %c0_6 = arith.constant 0 : index
    %c0_7 = arith.constant 0 : index
    %13 = vector.load %arg3[%c0_5, %c0_6, %c0_7] : memref<4x32x8xbf16, #tpu.memory_space<vmem>>, vector<4x32x8xbf16>
    "tpu.trace_start"() <{level = 10 : i32, message = "klh,khd->kld"}> : () -> ()
    %cst_8 = arith.constant dense<0.000000e+00> : vector<4x16x8xf32>
    %14 = tpu.matmul %10, %13, %cst_8 {dimension_numbers = #tpu.dot_dimension_numbers<[2], [1], [1], [2], [0, 0, 0, 1, 1, 2], [0], [0]>} : vector<4x16x32xbf16>, vector<4x32x8xbf16>, vector<4x16x8xf32> -> vector<4x16x8xf32>
    "tpu.trace_stop"() : () -> ()
    %c0_9 = arith.constant 0 : index
    %c0_10 = arith.constant 0 : index
    %c0_11 = arith.constant 0 : index
    %15 = vector.load %arg4[%c0_9, %c0_10, %c0_11] : memref<4x32x8xbf16, #tpu.memory_space<vmem>>, vector<4x32x8xbf16>
    "tpu.trace_start"() <{level = 10 : i32, message = "klh,khd->kld"}> : () -> ()
    %cst_12 = arith.constant dense<0.000000e+00> : vector<4x16x8xf32>
    %16 = tpu.matmul %10, %15, %cst_12 {dimension_numbers = #tpu.dot_dimension_numbers<[2], [1], [1], [2], [0, 0, 0, 1, 1, 2], [0], [0]>} : vector<4x16x32xbf16>, vector<4x32x8xbf16>, vector<4x16x8xf32> -> vector<4x16x8xf32>
    "tpu.trace_stop"() : () -> ()
    %17 = arith.truncf %12 : vector<4x8x8xf32> to vector<4x8x8xbf16>
    %18 = arith.truncf %14 : vector<4x16x8xf32> to vector<4x16x8xbf16>
    "tpu.trace_start"() <{level = 10 : i32, message = "kmd,kld->kml"}> : () -> ()
    %cst_13 = arith.constant dense<0.000000e+00> : vector<4x8x16xf32>
    %19 = tpu.matmul %17, %18, %cst_13 {dimension_numbers = #tpu.dot_dimension_numbers<[2], [2], [1], [1], [0, 0, 0, 1, 1, 1], [0], [0]>} : vector<4x8x8xbf16>, vector<4x16x8xbf16>, vector<4x8x16xf32> -> vector<4x8x16xf32>
    "tpu.trace_stop"() : () -> ()
    %cst_14 = arith.constant 0.176776692 : f32
    %20 = vector.broadcast %cst_14 : f32 to vector<4x8x16xf32>
    %21 = arith.mulf %19, %20 : vector<4x8x16xf32>
    %cst_15 = arith.constant dense<0xFF800000> : vector<4x8xf32>
    %22 = vector.multi_reduction <maximumf>, %21, %cst_15 [2] : vector<4x8x16xf32> to vector<4x8xf32>
    %23 = vector.shape_cast %22 : vector<4x8xf32> to vector<4x8x1xf32>
    %24 = vector.broadcast %23 : vector<4x8x1xf32> to vector<4x8x16xf32>
    %25 = arith.subf %21, %24 : vector<4x8x16xf32>
    %26 = math.exp %25 : vector<4x8x16xf32>
    %cst_16 = arith.constant dense<0.000000e+00> : vector<4x8xf32>
    %27 = vector.multi_reduction <add>, %26, %cst_16 [2] : vector<4x8x16xf32> to vector<4x8xf32>
    %28 = vector.shape_cast %27 : vector<4x8xf32> to vector<4x8x1xf32>
    %29 = tpu.reciprocal %28 {approx = true} : vector<4x8x1xf32> -> vector<4x8x1xf32>
    %30 = vector.broadcast %29 : vector<4x8x1xf32> to vector<4x8x16xf32>
    %31 = arith.mulf %26, %30 : vector<4x8x16xf32>
    %c0_17 = arith.constant 0 : index
    %c0_18 = arith.constant 0 : index
    %c0_19 = arith.constant 0 : index
    %32 = vector.load %arg10[%c0_17, %c0_18, %c0_19] : memref<4x8x16xf32, #tpu.memory_space<vmem>>, vector<4x8x16xf32>
    %33 = arith.mulf %31, %32 : vector<4x8x16xf32>
    %34 = arith.truncf %33 : vector<4x8x16xf32> to vector<4x8x16xbf16>
    %35 = arith.truncf %16 : vector<4x16x8xf32> to vector<4x16x8xbf16>
    "tpu.trace_start"() <{level = 10 : i32, message = "kml,kld->kmd"}> : () -> ()
    %cst_20 = arith.constant dense<0.000000e+00> : vector<4x8x8xf32>
    %36 = tpu.matmul %34, %35, %cst_20 {dimension_numbers = #tpu.dot_dimension_numbers<[2], [1], [1], [2], [0, 0, 0, 1, 1, 2], [0], [0]>} : vector<4x8x16xbf16>, vector<4x16x8xbf16>, vector<4x8x8xf32> -> vector<4x8x8xf32>
    "tpu.trace_stop"() : () -> ()
    %37 = arith.truncf %36 : vector<4x8x8xf32> to vector<4x8x8xbf16>
    %c0_21 = arith.constant 0 : index
    %c0_22 = arith.constant 0 : index
    %c0_23 = arith.constant 0 : index
    %38 = vector.load %arg5[%c0_21, %c0_22, %c0_23] : memref<4x8x32xbf16, #tpu.memory_space<vmem>>, vector<4x8x32xbf16>
    "tpu.trace_start"() <{level = 10 : i32, message = "kmd,kdh->kmh"}> : () -> ()
    %cst_24 = arith.constant dense<0.000000e+00> : vector<4x8x32xf32>
    %39 = tpu.matmul %37, %38, %cst_24 {dimension_numbers = #tpu.dot_dimension_numbers<[2], [1], [1], [2], [0, 0, 0, 1, 1, 2], [0], [0]>} : vector<4x8x8xbf16>, vector<4x8x32xbf16>, vector<4x8x32xf32> -> vector<4x8x32xf32>
    "tpu.trace_stop"() : () -> ()
    %cst_25 = arith.constant dense<0.000000e+00> : vector<8x32xf32>
    %40 = vector.multi_reduction <add>, %39, %cst_25 [0] : vector<4x8x32xf32> to vector<8x32xf32>
    %41 = arith.addf %2, %40 : vector<8x32xf32>
    %cst_26 = arith.constant dense<0.000000e+00> : vector<8xf32>
    %42 = vector.multi_reduction <add>, %41, %cst_26 [1] : vector<8x32xf32> to vector<8xf32>
    %43 = vector.shape_cast %42 : vector<8xf32> to vector<8x1xf32>
    %cst_27 = arith.constant 3.200000e+01 : f32
    %44 = vector.broadcast %cst_27 : f32 to vector<8x1xf32>
    %45 = arith.divf %43, %44 : vector<8x1xf32>
    %46 = vector.broadcast %45 : vector<8x1xf32> to vector<8x32xf32>
    %47 = arith.subf %41, %46 : vector<8x32xf32>
    %48 = arith.mulf %47, %47 : vector<8x32xf32>
    %cst_28 = arith.constant dense<0.000000e+00> : vector<8xf32>
    %49 = vector.multi_reduction <add>, %48, %cst_28 [1] : vector<8x32xf32> to vector<8xf32>
    %50 = vector.shape_cast %49 : vector<8xf32> to vector<8x1xf32>
    %cst_29 = arith.constant 3.200000e+01 : f32
    %51 = vector.broadcast %cst_29 : f32 to vector<8x1xf32>
    %52 = arith.divf %50, %51 : vector<8x1xf32>
    %53 = vector.broadcast %45 : vector<8x1xf32> to vector<8x32xf32>
    %54 = arith.subf %41, %53 : vector<8x32xf32>
    %cst_30 = arith.constant 9.99999974E-6 : f32
    %55 = vector.broadcast %cst_30 : f32 to vector<8x1xf32>
    %56 = arith.addf %52, %55 : vector<8x1xf32>
    %57 = math.rsqrt %56 : vector<8x1xf32>
    %58 = vector.broadcast %57 : vector<8x1xf32> to vector<8x32xf32>
    %59 = arith.mulf %54, %58 : vector<8x32xf32>
    %c0_31 = arith.constant 0 : index
    %c0_32 = arith.constant 0 : index
    %c0_33 = arith.constant 0 : index
    %60 = vector.load %arg8[%c0_31, %c0_32, %c0_33] : memref<5x8x32xf32, #tpu.memory_space<vmem>>, vector<1x8x32xf32>
    %61 = vector.shape_cast %60 : vector<1x8x32xf32> to vector<8x32xf32>
    %62 = arith.mulf %59, %61 : vector<8x32xf32>
    %c1 = arith.constant 1 : index
    %c0_34 = arith.constant 0 : index
    %c0_35 = arith.constant 0 : index
    %63 = vector.load %arg8[%c1, %c0_34, %c0_35] : memref<5x8x32xf32, #tpu.memory_space<vmem>>, vector<1x8x32xf32>
    %64 = vector.shape_cast %63 : vector<1x8x32xf32> to vector<8x32xf32>
    %65 = arith.addf %62, %64 : vector<8x32xf32>
    %66 = arith.truncf %65 : vector<8x32xf32> to vector<8x32xbf16>
    %c0_36 = arith.constant 0 : index
    %c0_37 = arith.constant 0 : index
    %67 = vector.load %arg6[%c0_36, %c0_37] : memref<32x64xbf16, #tpu.memory_space<vmem>>, vector<32x64xbf16>
    %cst_38 = arith.constant dense<0.000000e+00> : vector<8x64xf32>
    %68 = tpu.matmul %66, %67, %cst_38 {dimension_numbers = #tpu.dot_dimension_numbers<[1], [0], [0], [1], [0, 0, 1, 1], [], []>} : vector<8x32xbf16>, vector<32x64xbf16>, vector<8x64xf32> -> vector<8x64xf32>
    %c0_39 = arith.constant 0 : index
    %c0_40 = arith.constant 0 : index
    %69 = vector.load %arg9[%c0_39, %c0_40] : memref<8x64xf32, #tpu.memory_space<vmem>>, vector<8x64xf32>
    %70 = arith.addf %68, %69 : vector<8x64xf32>
    %cst_41 = arith.constant 0.000000e+00 : f32
    %71 = vector.broadcast %cst_41 : f32 to vector<8x64xf32>
    %72 = arith.maximumf %70, %71 : vector<8x64xf32>
    %73 = arith.truncf %72 : vector<8x64xf32> to vector<8x64xbf16>
    %c0_42 = arith.constant 0 : index
    %c0_43 = arith.constant 0 : index
    %74 = vector.load %arg7[%c0_42, %c0_43] : memref<64x32xbf16, #tpu.memory_space<vmem>>, vector<64x32xbf16>
    %cst_44 = arith.constant dense<0.000000e+00> : vector<8x32xf32>
    %75 = tpu.matmul %73, %74, %cst_44 {dimension_numbers = #tpu.dot_dimension_numbers<[1], [0], [0], [1], [0, 0, 1, 1], [], []>} : vector<8x64xbf16>, vector<64x32xbf16>, vector<8x32xf32> -> vector<8x32xf32>
    %c2 = arith.constant 2 : index
    %c0_45 = arith.constant 0 : index
    %c0_46 = arith.constant 0 : index
    %76 = vector.load %arg8[%c2, %c0_45, %c0_46] : memref<5x8x32xf32, #tpu.memory_space<vmem>>, vector<1x8x32xf32>
    %77 = vector.shape_cast %76 : vector<1x8x32xf32> to vector<8x32xf32>
    %78 = arith.addf %75, %77 : vector<8x32xf32>
    %79 = arith.addf %65, %78 : vector<8x32xf32>
    %cst_47 = arith.constant dense<0.000000e+00> : vector<8xf32>
    %80 = vector.multi_reduction <add>, %79, %cst_47 [1] : vector<8x32xf32> to vector<8xf32>
    %81 = vector.shape_cast %80 : vector<8xf32> to vector<8x1xf32>
    %cst_48 = arith.constant 3.200000e+01 : f32
    %82 = vector.broadcast %cst_48 : f32 to vector<8x1xf32>
    %83 = arith.divf %81, %82 : vector<8x1xf32>
    %84 = vector.broadcast %83 : vector<8x1xf32> to vector<8x32xf32>
    %85 = arith.subf %79, %84 : vector<8x32xf32>
    %86 = arith.mulf %85, %85 : vector<8x32xf32>
    %cst_49 = arith.constant dense<0.000000e+00> : vector<8xf32>
    %87 = vector.multi_reduction <add>, %86, %cst_49 [1] : vector<8x32xf32> to vector<8xf32>
    %88 = vector.shape_cast %87 : vector<8xf32> to vector<8x1xf32>
    %cst_50 = arith.constant 3.200000e+01 : f32
    %89 = vector.broadcast %cst_50 : f32 to vector<8x1xf32>
    %90 = arith.divf %88, %89 : vector<8x1xf32>
    %91 = vector.broadcast %83 : vector<8x1xf32> to vector<8x32xf32>
    %92 = arith.subf %79, %91 : vector<8x32xf32>
    %cst_51 = arith.constant 9.99999974E-6 : f32
    %93 = vector.broadcast %cst_51 : f32 to vector<8x1xf32>
    %94 = arith.addf %90, %93 : vector<8x1xf32>
    %95 = math.rsqrt %94 : vector<8x1xf32>
    %96 = vector.broadcast %95 : vector<8x1xf32> to vector<8x32xf32>
    %97 = arith.mulf %92, %96 : vector<8x32xf32>
    %c3 = arith.constant 3 : index
    %c0_52 = arith.constant 0 : index
    %c0_53 = arith.constant 0 : index
    %98 = vector.load %arg8[%c3, %c0_52, %c0_53] : memref<5x8x32xf32, #tpu.memory_space<vmem>>, vector<1x8x32xf32>
    %99 = vector.shape_cast %98 : vector<1x8x32xf32> to vector<8x32xf32>
    %100 = arith.mulf %97, %99 : vector<8x32xf32>
    %c4 = arith.constant 4 : index
    %c0_54 = arith.constant 0 : index
    %c0_55 = arith.constant 0 : index
    %101 = vector.load %arg8[%c4, %c0_54, %c0_55] : memref<5x8x32xf32, #tpu.memory_space<vmem>>, vector<1x8x32xf32>
    %102 = vector.shape_cast %101 : vector<1x8x32xf32> to vector<8x32xf32>
    %103 = arith.addf %100, %102 : vector<8x32xf32>
    %c0_56 = arith.constant 0 : index
    %c0_57 = arith.constant 0 : index
    %c0_58 = arith.constant 0 : index
    %104 = vector.load %arg11[%c0_56, %c0_57, %c0_58] : memref<1x8x32xf32, #tpu.memory_space<vmem>>, vector<1x8x32xf32>
    %105 = vector.shape_cast %104 : vector<1x8x32xf32> to vector<8x32xf32>
    %106 = vector.shape_cast %103 : vector<8x32xf32> to vector<1x8x32xf32>
    tpu.vector_store %arg11[%c0_56, %c0_57, %c0_58], %106 {strides = array<i32>} : memref<1x8x32xf32, #tpu.memory_space<vmem>>, vector<1x8x32xf32>,
    return
  }
  func.func @transform_0(%arg0: i32) -> (i32, i32, i32) {
    %c0_i32 = arith.constant 0 : i32
    %c0_i32_0 = arith.constant 0 : i32
    %c0_i32_1 = arith.constant 0 : i32
    return %arg0, %c0_i32, %c0_i32_0 : i32, i32, i32
  }
  func.func @transform_1(%arg0: i32) -> (i32, i32, i32) {
    %c0_i32 = arith.constant 0 : i32
    %c0_i32_0 = arith.constant 0 : i32
    %c0_i32_1 = arith.constant 0 : i32
    %c0_i32_2 = arith.constant 0 : i32
    return %c0_i32, %c0_i32_0, %c0_i32_1 : i32, i32, i32
  }
  func.func @transform_2(%arg0: i32) -> (i32, i32, i32) {
    %c0_i32 = arith.constant 0 : i32
    %c0_i32_0 = arith.constant 0 : i32
    %c0_i32_1 = arith.constant 0 : i32
    %c0_i32_2 = arith.constant 0 : i32
    return %c0_i32, %c0_i32_0, %c0_i32_1 : i32, i32, i32
  }
  func.func @transform_3(%arg0: i32) -> (i32, i32, i32) {
    %c0_i32 = arith.constant 0 : i32
    %c0_i32_0 = arith.constant 0 : i32
    %c0_i32_1 = arith.constant 0 : i32
    %c0_i32_2 = arith.constant 0 : i32
    return %c0_i32, %c0_i32_0, %c0_i32_1 : i32, i32, i32
  }
  func.func @transform_4(%arg0: i32) -> (i32, i32, i32) {
    %c0_i32 = arith.constant 0 : i32
    %c0_i32_0 = arith.constant 0 : i32
    %c0_i32_1 = arith.constant 0 : i32
    %c0_i32_2 = arith.constant 0 : i32
    return %c0_i32, %c0_i32_0, %c0_i32_1 : i32, i32, i32
  }
  func.func @transform_5(%arg0: i32) -> (i32, i32) {
    %c0_i32 = arith.constant 0 : i32
    %c0_i32_0 = arith.constant 0 : i32
    %c0_i32_1 = arith.constant 0 : i32
    return %c0_i32, %c0_i32_0 : i32, i32
  }
  func.func @transform_6(%arg0: i32) -> (i32, i32) {
    %c0_i32 = arith.constant 0 : i32
    %c0_i32_0 = arith.constant 0 : i32
    %c0_i32_1 = arith.constant 0 : i32
    return %c0_i32, %c0_i32_0 : i32, i32
  }
  func.func @transform_7(%arg0: i32) -> (i32, i32, i32) {
    %c0_i32 = arith.constant 0 : i32
    %c0_i32_0 = arith.constant 0 : i32
    %c0_i32_1 = arith.constant 0 : i32
    %c0_i32_2 = arith.constant 0 : i32
    return %c0_i32, %c0_i32_0, %c0_i32_1 : i32, i32, i32
  }
  func.func @transform_8(%arg0: i32) -> (i32, i32) {
    %c0_i32 = arith.constant 0 : i32
    %c0_i32_0 = arith.constant 0 : i32
    %c0_i32_1 = arith.constant 0 : i32
    return %c0_i32, %c0_i32_0 : i32, i32
  }
  func.func @transform_9(%arg0: i32) -> (i32, i32, i32) {
    %c0_i32 = arith.constant 0 : i32
    %c0_i32_0 = arith.constant 0 : i32
    %c0_i32_1 = arith.constant 0 : i32
    %c0_i32_2 = arith.constant 0 : i32
    return %c0_i32, %c0_i32_0, %c0_i32_1 : i32, i32, i32
  }
  func.func @transform_10(%arg0: i32) -> (i32, i32, i32) {
    %c0_i32 = arith.constant 0 : i32
    %c0_i32_0 = arith.constant 0 : i32
    %c0_i32_1 = arith.constant 0 : i32
    return %arg0, %c0_i32, %c0_i32_0 : i32, i32, i32
  }
}

</mosaic_0001>

<llo_original>
// kernel: _lambda_.1
$region0: #{_lambda_.1}
  #allocation0 [shape = 'u32[]', space=smem, size = 0x4, offset = 0x4, fixed_abs, tag = 'smem constant byte address 0x4 - core index']
  #allocation1 [shape = 'u32[72,128]{1,0:T(1,128)}', space=vmem, size = 0x9000, scoped, tag = 'internal scratch']
  %s0 = inlined_call_operand.vmem [shape: f32[1,16,32], index: 0, kind: input, shape index: {}]
  %s1 = inlined_call_operand.hbm [shape: bf16[4,32,8], index: 1, kind: input, shape index: {}]
  %s2 = inlined_call_operand.hbm [shape: bf16[4,32,8], index: 2, kind: input, shape index: {}]
  %s3 = inlined_call_operand.hbm [shape: bf16[4,32,8], index: 3, kind: input, shape index: {}]
  %s4 = inlined_call_operand.vmem [shape: bf16[4,8,32], index: 4, kind: input, shape index: {}]
  %s5 = inlined_call_operand.vmem [shape: bf16[32,64], index: 5, kind: input, shape index: {}]
  %s6 = inlined_call_operand.vmem [shape: bf16[64,32], index: 6, kind: input, shape index: {}]
  %s7 = inlined_call_operand.vmem [shape: f32[5,8,32], index: 7, kind: input, shape index: {}]
  %s8 = inlined_call_operand.vmem [shape: f32[8,64], index: 8, kind: input, shape index: {}]
  %s9 = inlined_call_operand.vmem [shape: f32[4,8,16], index: 9, kind: input, shape index: {}]
  %s10 = inlined_call_operand.hbm [shape: f32[1,8,32], index: 10, kind: output, shape index: {}]
  %s11 = sld [smem:[#allocation0]]
  $region62: #{_lambda_.1} parent=0
    _
  %s13 = ssub.s32 1, %s11
  %s14 = scalar_select 0, %s13, %s11
  $region1: #{_lambda_.1} parent=0
    #allocation2 [shape = 'u8[32768]{0}', space=vmem, size = 0x8000, scoped, tag = 'input window, operand 1, single buffered']
    #allocation3 [shape = 's32[1]{0}', space=sflag, size = 0x4, scoped, tag = 'scoped memory for _lambda_.1']
    #allocation4 [shape = 's32[1]{0}', space=sflag, size = 0x4, scoped, tag = 'scoped memory for _lambda_.1']
    #allocation5 [shape = 'u8[32768]{0}', space=vmem, size = 0x8000, scoped, tag = 'input window, operand 2, single buffered']
    #allocation6 [shape = 's32[1]{0}', space=sflag, size = 0x4, scoped, tag = 'scoped memory for _lambda_.1']
    #allocation7 [shape = 'u8[32768]{0}', space=vmem, size = 0x8000, scoped, tag = 'input window, operand 3, single buffered']
    #allocation8 [shape = 'u8[4096]{0}', space=vmem, size = 0x1000, scoped, tag = 'output window, operand 0, single buffered']
    %15 = vsyncpa [#allocation3], 0
    %16 = vsyncpa [#allocation6], 0
    %17 = vsyncpa [#allocation4], 0
    // Predicated region
    $region2: #{_lambda_.1} parent=1 // pred_check
      _
    $region3: #{_lambda_.1} parent=1 // pred_check_branch
      %19 = sbr.rel (0) target = $region5
    $region4: #{_lambda_.1} parent=1 // pred_region
      _
    $region5: #{_lambda_.1} parent=1 // pred_fallthru
      _
    // Predicated region
    $region6: #{_lambda_.1} parent=1 // pred_check
      _
    $region7: #{_lambda_.1} parent=1 // pred_check_branch
      %21 = sbr.rel (0) target = $region9
    $region8: #{_lambda_.1} parent=1 // pred_region
      %23 = vsyncadd [#allocation3], 0
      %s24 = sshll.u32 %s1, 4
      %s25 = int_to_ptr.hbm [resolvable:$true] %s24
      %s26 = sshll.u32 [#allocation2], 4
      %s27 = int_to_ptr.vmem [resolvable:$true] %s26
      %32 = dma.hbm_to_vmem [thread:$0]  %s25, 1024, %s27, [#allocation3], 64, 64, 4
    $region9: #{_lambda_.1} parent=1 // pred_fallthru
      _
    // Predicated region
    $region10: #{_lambda_.1} parent=1 // pred_check
      _
    $region11: #{_lambda_.1} parent=1 // pred_check_branch
      %34 = sbr.rel (0) target = $region13
    $region12: #{_lambda_.1} parent=1 // pred_region
      %36 = vsyncadd [#allocation6], 0
      %s37 = sshll.u32 %s2, 4
      %s38 = int_to_ptr.hbm [resolvable:$true] %s37
      %s39 = sshll.u32 [#allocation5], 4
      %s40 = int_to_ptr.vmem [resolvable:$true] %s39
      %45 = dma.hbm_to_vmem [thread:$0]  %s38, 1024, %s40, [#allocation6], 64, 64, 4
    $region13: #{_lambda_.1} parent=1 // pred_fallthru
      _
    // Predicated region
    $region14: #{_lambda_.1} parent=1 // pred_check
      _
    $region15: #{_lambda_.1} parent=1 // pred_check_branch
      %47 = sbr.rel (0) target = $region17
    $region16: #{_lambda_.1} parent=1 // pred_region
      %49 = vsyncadd [#allocation6], 0
      %s50 = sshll.u32 %s3, 4
      %s51 = int_to_ptr.hbm [resolvable:$true] %s50
      %s52 = sshll.u32 [#allocation7], 4
      %s53 = int_to_ptr.vmem [resolvable:$true] %s52
      %58 = dma.hbm_to_vmem [thread:$0]  %s51, 1024, %s53, [#allocation6], 64, 64, 4
    $region17: #{_lambda_.1} parent=1 // pred_fallthru
      _
    // Predicated region
    $region18: #{_lambda_.1} parent=1 // pred_check
      _
    $region19: #{_lambda_.1} parent=1 // pred_check_branch
      %60 = sbr.rel (0) target = $region21
    $region20: #{_lambda_.1} parent=1 // pred_region
      _
    $region21: #{_lambda_.1} parent=1 // pred_fallthru
      _
    // Predicated region
    $region22: #{_lambda_.1} parent=1 // pred_check
      _
    $region23: #{_lambda_.1} parent=1 // pred_check_branch
      %62 = sbr.rel (0) target = $region25
    $region24: #{_lambda_.1} parent=1 // pred_region
      _
    $region25: #{_lambda_.1} parent=1 // pred_fallthru
      _
    // Predicated region
    $region26: #{_lambda_.1} parent=1 // pred_check
      _
    $region27: #{_lambda_.1} parent=1 // pred_check_branch
      %64 = sbr.rel (0) target = $region29
    $region28: #{_lambda_.1} parent=1 // pred_region
      _
    $region29: #{_lambda_.1} parent=1 // pred_fallthru
      _
    // Predicated region
    $region30: #{_lambda_.1} parent=1 // pred_check
      _
    $region31: #{_lambda_.1} parent=1 // pred_check_branch
      %66 = sbr.rel (0) target = $region33
    $region32: #{_lambda_.1} parent=1 // pred_region
      _
    $region33: #{_lambda_.1} parent=1 // pred_fallthru
      _
    // Predicated region
    $region34: #{_lambda_.1} parent=1 // pred_check
      _
    $region35: #{_lambda_.1} parent=1 // pred_check_branch
      %68 = sbr.rel (0) target = $region37
    $region36: #{_lambda_.1} parent=1 // pred_region
      _
    $region37: #{_lambda_.1} parent=1 // pred_fallthru
      _
    // Predicated region
    $region38: #{_lambda_.1} parent=1 // pred_check
      _
    $region39: #{_lambda_.1} parent=1 // pred_check_branch
      %70 = sbr.rel (0) target = $region41
    $region40: #{_lambda_.1} parent=1 // pred_region
      _
    $region41: #{_lambda_.1} parent=1 // pred_fallthru
      _
    // Predicated region
    $region42: #{_lambda_.1} parent=1 // pred_check
      _
    $region43: #{_lambda_.1} parent=1 // pred_check_branch
      %72 = sbr.rel (0) target = $region45
    $region44: #{_lambda_.1} parent=1 // pred_region
      %74 = dma.done [#allocation3], 1024
    $region45: #{_lambda_.1} parent=1 // pred_fallthru
      _
    // Predicated region
    $region46: #{_lambda_.1} parent=1 // pred_check
      _
    $region47: #{_lambda_.1} parent=1 // pred_check_branch
      %76 = sbr.rel (0) target = $region49
    $region48: #{_lambda_.1} parent=1 // pred_region
      %78 = dma.done [#allocation6], 1024
    $region49: #{_lambda_.1} parent=1 // pred_fallthru
      _
    // Predicated region
    $region50: #{_lambda_.1} parent=1 // pred_check
      _
    $region51: #{_lambda_.1} parent=1 // pred_check_branch
      %80 = sbr.rel (0) target = $region53
    $region52: #{_lambda_.1} parent=1 // pred_region
      %82 = dma.done [#allocation6], 1024
    $region53: #{_lambda_.1} parent=1 // pred_fallthru
      _
    %v84 = vld [vmem:[%s0] sm:$0xff]
    %v85 = vld [vmem:[%s0 + $0x8] sm:$0xff]
    %v86 = vpack.c.bf16 %v84, %v84
    %v87 = vpack.c.bf16 %v85, %v85
    %v88 = vld [vmem:[#allocation2] sm:$0xf]
    %v89 = vld [vmem:[#allocation2 + $0x4] sm:$0xf]
    %v90 = vld [vmem:[#allocation2 + $0x8] sm:$0xf]
    %v91 = vld [vmem:[#allocation2 + $0xc] sm:$0xf]
    %v92 = vld [vmem:[#allocation2 + $0x10] sm:$0xf]
    %v93 = vld [vmem:[#allocation2 + $0x14] sm:$0xf]
    %v94 = vld [vmem:[#allocation2 + $0x18] sm:$0xf]
    %v95 = vld [vmem:[#allocation2 + $0x1c] sm:$0xf]
    %v96 = vld [vmem:[#allocation2 + $0x20] sm:$0xf]
    %v97 = vld [vmem:[#allocation2 + $0x24] sm:$0xf]
    %v98 = vld [vmem:[#allocation2 + $0x28] sm:$0xf]
    %v99 = vld [vmem:[#allocation2 + $0x2c] sm:$0xf]
    %v100 = vld [vmem:[#allocation2 + $0x30] sm:$0xf]
    %v101 = vld [vmem:[#allocation2 + $0x34] sm:$0xf]
    %v102 = vld [vmem:[#allocation2 + $0x38] sm:$0xf]
    %v103 = vld [vmem:[#allocation2 + $0x3c] sm:$0xf]
    %v108 = vunpack.c.l.b16 %v88
    %v109 = vunpack.c.l.b16 %v89
    %v110 = vunpack.c.l.b16 %v90
    %v111 = vunpack.c.l.b16 %v91
    %v112 = vpack.c.b16 %v109, %v108
    %v113 = vpack.c.b16 %v111, %v110
    %vm116 = vcmask 261120
    %v118 = vsel %vm116, %v87, 0
    %120 = vmatpush.bf16.msra.mxu0 0
    %121 = vmatpush.bf16.msra.mxu0 0
    %122 = vmatpush.bf16.msra.mxu0 0
    %123 = vmatpush.bf16.msra.mxu0 0
    %124 = vmatpush.bf16.msra.mxu0 0
    %125 = vmatpush.bf16.msra.mxu0 0
    %126 = vmatpush.bf16.msra.mxu0 %v113
    %127 = vmatpush.bf16.msra.mxu0 %v112
    %128 = vmatmul.bf16.gmra.mxu0 %v118
    %v129 = vpop.f32.mrf.mxu0
    %v130 = vadd.f32 0.0, %v129
    %v131 = vpop.f32.mrf.mxu0
    %132 = vdwg.mxu0
    %v137 = vunpack.c.l.b16 %v92
    %v138 = vunpack.c.l.b16 %v93
    %v139 = vunpack.c.l.b16 %v94
    %v140 = vunpack.c.l.b16 %v95
    %v141 = vpack.c.b16 %v138, %v137
    %v142 = vpack.c.b16 %v140, %v139
    %145 = vmatpush.bf16.msra.mxu0 0
    %146 = vmatpush.bf16.msra.mxu0 0
    %147 = vmatpush.bf16.msra.mxu0 0
    %148 = vmatpush.bf16.msra.mxu0 0
    %149 = vmatpush.bf16.msra.mxu0 0
    %150 = vmatpush.bf16.msra.mxu0 0
    %151 = vmatpush.bf16.msra.mxu0 %v142
    %152 = vmatpush.bf16.msra.mxu0 %v141
    %153 = vmatmul.bf16.gmra.mxu0 %v118
    %v154 = vpop.f32.mrf.mxu0
    %v155 = vadd.f32 0.0, %v154
    %v156 = vpop.f32.mrf.mxu0
    %157 = vdwg.mxu0
    %v162 = vunpack.c.l.b16 %v96
    %v163 = vunpack.c.l.b16 %v97
    %v164 = vunpack.c.l.b16 %v98
    %v165 = vunpack.c.l.b16 %v99
    %v166 = vpack.c.b16 %v163, %v162
    %v167 = vpack.c.b16 %v165, %v164
    %170 = vmatpush.bf16.msra.mxu0 0
    %171 = vmatpush.bf16.msra.mxu0 0
    %172 = vmatpush.bf16.msra.mxu0 0
    %173 = vmatpush.bf16.msra.mxu0 0
    %174 = vmatpush.bf16.msra.mxu0 0
    %175 = vmatpush.bf16.msra.mxu0 0
    %176 = vmatpush.bf16.msra.mxu0 %v167
    %177 = vmatpush.bf16.msra.mxu0 %v166
    %178 = vmatmul.bf16.gmra.mxu0 %v118
    %v179 = vpop.f32.mrf.mxu0
    %v180 = vadd.f32 0.0, %v179
    %v181 = vpop.f32.mrf.mxu0
    %182 = vdwg.mxu0
    %v187 = vunpack.c.l.b16 %v100
    %v188 = vunpack.c.l.b16 %v101
    %v189 = vunpack.c.l.b16 %v102
    %v190 = vunpack.c.l.b16 %v103
    %v191 = vpack.c.b16 %v188, %v187
    %v192 = vpack.c.b16 %v190, %v189
    %195 = vmatpush.bf16.msra.mxu0 0
    %196 = vmatpush.bf16.msra.mxu0 0
    %197 = vmatpush.bf16.msra.mxu0 0
    %198 = vmatpush.bf16.msra.mxu0 0
    %199 = vmatpush.bf16.msra.mxu0 0
    %200 = vmatpush.bf16.msra.mxu0 0
    %201 = vmatpush.bf16.msra.mxu0 %v192
    %202 = vmatpush.bf16.msra.mxu0 %v191
    %203 = vmatmul.bf16.gmra.mxu0 %v118
    %v204 = vpop.f32.mrf.mxu0
    %v205 = vadd.f32 0.0, %v204
    %v206 = vpop.f32.mrf.mxu0
    %207 = vdwg.mxu0
    %v208 = vld [vmem:[#allocation5] sm:$0xf]
    %v209 = vld [vmem:[#allocation5 + $0x4] sm:$0xf]
    %v210 = vld [vmem:[#allocation5 + $0x8] sm:$0xf]
    %v211 = vld [vmem:[#allocation5 + $0xc] sm:$0xf]
    %v212 = vld [vmem:[#allocation5 + $0x10] sm:$0xf]
    %v213 = vld [vmem:[#allocation5 + $0x14] sm:$0xf]
    %v214 = vld [vmem:[#allocation5 + $0x18] sm:$0xf]
    %v215 = vld [vmem:[#allocation5 + $0x1c] sm:$0xf]
    %v216 = vld [vmem:[#allocation5 + $0x20] sm:$0xf]
    %v217 = vld [vmem:[#allocation5 + $0x24] sm:$0xf]
    %v218 = vld [vmem:[#allocation5 + $0x28] sm:$0xf]
    %v219 = vld [vmem:[#allocation5 + $0x2c] sm:$0xf]
    %v220 = vld [vmem:[#allocation5 + $0x30] sm:$0xf]
    %v221 = vld [vmem:[#allocation5 + $0x34] sm:$0xf]
    %v222 = vld [vmem:[#allocation5 + $0x38] sm:$0xf]
    %v223 = vld [vmem:[#allocation5 + $0x3c] sm:$0xf]
    %v226 = vunpack.c.l.b16 %v86
    %v227 = vunpack.c.l.b16 %v87
    %v228 = vpack.c.b16 %v227, %v226
    %v233 = vunpack.c.l.b16 %v208
    %v234 = vunpack.c.l.b16 %v209
    %v235 = vunpack.c.l.b16 %v210
    %v236 = vunpack.c.l.b16 %v211
    %v237 = vpack.c.b16 %v234, %v233
    %v238 = vpack.c.b16 %v236, %v235
    %v242 = vsel %vm116, %v228, 0
    %244 = vmatpush.bf16.msra.mxu0 0
    %245 = vmatpush.bf16.msra.mxu0 0
    %246 = vmatpush.bf16.msra.mxu0 0
    %247 = vmatpush.bf16.msra.mxu0 0
    %248 = vmatpush.bf16.msra.mxu0 0
    %249 = vmatpush.bf16.msra.mxu0 0
    %250 = vmatpush.bf16.msra.mxu0 %v238
    %251 = vmatpush.bf16.msra.mxu0 %v237
    %252 = vmatmul.bf16.gmra.mxu0 %v242
    %v253 = vpop.f32.mrf.mxu0
    %v254 = vadd.f32 0.0, %v253
    %v255 = vpop.f32.mrf.mxu0
    %v256 = vadd.f32 0.0, %v255
    %257 = vdwg.mxu0
    %v262 = vunpack.c.l.b16 %v212
    %v263 = vunpack.c.l.b16 %v213
    %v264 = vunpack.c.l.b16 %v214
    %v265 = vunpack.c.l.b16 %v215
    %v266 = vpack.c.b16 %v263, %v262
    %v267 = vpack.c.b16 %v265, %v264
    %270 = vmatpush.bf16.msra.mxu0 0
    %271 = vmatpush.bf16.msra.mxu0 0
    %272 = vmatpush.bf16.msra.mxu0 0
    %273 = vmatpush.bf16.msra.mxu0 0
    %274 = vmatpush.bf16.msra.mxu0 0
    %275 = vmatpush.bf16.msra.mxu0 0
    %276 = vmatpush.bf16.msra.mxu0 %v267
    %277 = vmatpush.bf16.msra.mxu0 %v266
    %278 = vmatmul.bf16.gmra.mxu0 %v242
    %v279 = vpop.f32.mrf.mxu0
    %v280 = vadd.f32 0.0, %v279
    %v281 = vpop.f32.mrf.mxu0
    %v282 = vadd.f32 0.0, %v281
    %283 = vdwg.mxu0
    %v288 = vunpack.c.l.b16 %v216
    %v289 = vunpack.c.l.b16 %v217
    %v290 = vunpack.c.l.b16 %v218
    %v291 = vunpack.c.l.b16 %v219
    %v292 = vpack.c.b16 %v289, %v288
    %v293 = vpack.c.b16 %v291, %v290
    %296 = vmatpush.bf16.msra.mxu0 0
    %297 = vmatpush.bf16.msra.mxu0 0
    %298 = vmatpush.bf16.msra.mxu0 0
    %299 = vmatpush.bf16.msra.mxu0 0
    %300 = vmatpush.bf16.msra.mxu0 0
    %301 = vmatpush.bf16.msra.mxu0 0
    %302 = vmatpush.bf16.msra.mxu0 %v293
    %303 = vmatpush.bf16.msra.mxu0 %v292
    %304 = vmatmul.bf16.gmra.mxu0 %v242
    %v305 = vpop.f32.mrf.mxu0
    %v306 = vadd.f32 0.0, %v305
    %v307 = vpop.f32.mrf.mxu0
    %v308 = vadd.f32 0.0, %v307
    %309 = vdwg.mxu0
    %v314 = vunpack.c.l.b16 %v220
    %v315 = vunpack.c.l.b16 %v221
    %v316 = vunpack.c.l.b16 %v222
    %v317 = vunpack.c.l.b16 %v223
    %v318 = vpack.c.b16 %v315, %v314
    %v319 = vpack.c.b16 %v317, %v316
    %322 = vmatpush.bf16.msra.mxu0 0
    %323 = vmatpush.bf16.msra.mxu0 0
    %324 = vmatpush.bf16.msra.mxu0 0
    %325 = vmatpush.bf16.msra.mxu0 0
    %326 = vmatpush.bf16.msra.mxu0 0
    %327 = vmatpush.bf16.msra.mxu0 0
    %328 = vmatpush.bf16.msra.mxu0 %v319
    %329 = vmatpush.bf16.msra.mxu0 %v318
    %330 = vmatmul.bf16.gmra.mxu0 %v242
    %v331 = vpop.f32.mrf.mxu0
    %v332 = vadd.f32 0.0, %v331
    %v333 = vpop.f32.mrf.mxu0
    %v334 = vadd.f32 0.0, %v333
    %335 = vdwg.mxu0
    %v336 = vld [vmem:[#allocation7] sm:$0xf]
    %v337 = vld [vmem:[#allocation7 + $0x4] sm:$0xf]
    %v338 = vld [vmem:[#allocation7 + $0x8] sm:$0xf]
    %v339 = vld [vmem:[#allocation7 + $0xc] sm:$0xf]
    %v340 = vld [vmem:[#allocation7 + $0x10] sm:$0xf]
    %v341 = vld [vmem:[#allocation7 + $0x14] sm:$0xf]
    %v342 = vld [vmem:[#allocation7 + $0x18] sm:$0xf]
    %v343 = vld [vmem:[#allocation7 + $0x1c] sm:$0xf]
    %v344 = vld [vmem:[#allocation7 + $0x20] sm:$0xf]
    %v345 = vld [vmem:[#allocation7 + $0x24] sm:$0xf]
    %v346 = vld [vmem:[#allocation7 + $0x28] sm:$0xf]
    %v347 = vld [vmem:[#allocation7 + $0x2c] sm:$0xf]
    %v348 = vld [vmem:[#allocation7 + $0x30] sm:$0xf]
    %v349 = vld [vmem:[#allocation7 + $0x34] sm:$0xf]
    %v350 = vld [vmem:[#allocation7 + $0x38] sm:$0xf]
    %v351 = vld [vmem:[#allocation7 + $0x3c] sm:$0xf]
    %v356 = vunpack.c.l.b16 %v336
    %v357 = vunpack.c.l.b16 %v337
    %v358 = vunpack.c.l.b16 %v338
    %v359 = vunpack.c.l.b16 %v339
    %v360 = vpack.c.b16 %v357, %v356
    %v361 = vpack.c.b16 %v359, %v358
    %364 = vmatpush.bf16.msra.mxu0 0
    %365 = vmatpush.bf16.msra.mxu0 0
    %366 = vmatpush.bf16.msra.mxu0 0
    %367 = vmatpush.bf16.msra.mxu0 0
    %368 = vmatpush.bf16.msra.mxu0 0
    %369 = vmatpush.bf16.msra.mxu0 0
    %370 = vmatpush.bf16.msra.mxu0 %v361
    %371 = vmatpush.bf16.msra.mxu0 %v360
    %372 = vmatmul.bf16.gmra.mxu0 %v242
    %v373 = vpop.f32.mrf.mxu0
    %v374 = vadd.f32 0.0, %v373
    %v375 = vpop.f32.mrf.mxu0
    %v376 = vadd.f32 0.0, %v375
    %377 = vdwg.mxu0
    %v382 = vunpack.c.l.b16 %v340
    %v383 = vunpack.c.l.b16 %v341
    %v384 = vunpack.c.l.b16 %v342
    %v385 = vunpack.c.l.b16 %v343
    %v386 = vpack.c.b16 %v383, %v382
    %v387 = vpack.c.b16 %v385, %v384
    %390 = vmatpush.bf16.msra.mxu0 0
    %391 = vmatpush.bf16.msra.mxu0 0
    %392 = vmatpush.bf16.msra.mxu0 0
    %393 = vmatpush.bf16.msra.mxu0 0
    %394 = vmatpush.bf16.msra.mxu0 0
    %395 = vmatpush.bf16.msra.mxu0 0
    %396 = vmatpush.bf16.msra.mxu0 %v387
    %397 = vmatpush.bf16.msra.mxu0 %v386
    %398 = vmatmul.bf16.gmra.mxu0 %v242
    %v399 = vpop.f32.mrf.mxu0
    %v400 = vadd.f32 0.0, %v399
    %v401 = vpop.f32.mrf.mxu0
    %v402 = vadd.f32 0.0, %v401
    %403 = vdwg.mxu0
    %v408 = vunpack.c.l.b16 %v344
    %v409 = vunpack.c.l.b16 %v345
    %v410 = vunpack.c.l.b16 %v346
    %v411 = vunpack.c.l.b16 %v347
    %v412 = vpack.c.b16 %v409, %v408
    %v413 = vpack.c.b16 %v411, %v410
    %416 = vmatpush.bf16.msra.mxu0 0
    %417 = vmatpush.bf16.msra.mxu0 0
    %418 = vmatpush.bf16.msra.mxu0 0
    %419 = vmatpush.bf16.msra.mxu0 0
    %420 = vmatpush.bf16.msra.mxu0 0
    %421 = vmatpush.bf16.msra.mxu0 0
    %422 = vmatpush.bf16.msra.mxu0 %v413
    %423 = vmatpush.bf16.msra.mxu0 %v412
    %424 = vmatmul.bf16.gmra.mxu0 %v242
    %v425 = vpop.f32.mrf.mxu0
    %v426 = vadd.f32 0.0, %v425
    %v427 = vpop.f32.mrf.mxu0
    %v428 = vadd.f32 0.0, %v427
    %429 = vdwg.mxu0
    %v434 = vunpack.c.l.b16 %v348
    %v435 = vunpack.c.l.b16 %v349
    %v436 = vunpack.c.l.b16 %v350
    %v437 = vunpack.c.l.b16 %v351
    %v438 = vpack.c.b16 %v435, %v434
    %v439 = vpack.c.b16 %v437, %v436
    %442 = vmatpush.bf16.msra.mxu0 0
    %443 = vmatpush.bf16.msra.mxu0 0
    %444 = vmatpush.bf16.msra.mxu0 0
    %445 = vmatpush.bf16.msra.mxu0 0
    %446 = vmatpush.bf16.msra.mxu0 0
    %447 = vmatpush.bf16.msra.mxu0 0
    %448 = vmatpush.bf16.msra.mxu0 %v439
    %449 = vmatpush.bf16.msra.mxu0 %v438
    %450 = vmatmul.bf16.gmra.mxu0 %v242
    %v451 = vpop.f32.mrf.mxu0
    %v452 = vadd.f32 0.0, %v451
    %v453 = vpop.f32.mrf.mxu0
    %v454 = vadd.f32 0.0, %v453
    %455 = vdwg.mxu0
    %v456 = vpack.c.bf16 %v130, %v130
    %v457 = vpack.c.bf16 %v155, %v155
    %v458 = vpack.c.bf16 %v180, %v180
    %v459 = vpack.c.bf16 %v205, %v205
    %v460 = vpack.c.bf16 %v254, %v254
    %v461 = vpack.c.bf16 %v256, %v256
    %v462 = vpack.c.bf16 %v280, %v280
    %v463 = vpack.c.bf16 %v282, %v282
    %v464 = vpack.c.bf16 %v306, %v306
    %v465 = vpack.c.bf16 %v308, %v308
    %v466 = vpack.c.bf16 %v332, %v332
    %v467 = vpack.c.bf16 %v334, %v334
    %v470 = vunpack.c.l.b16 %v460
    %v471 = vunpack.c.l.b16 %v461
    %v472 = vpack.c.b16 %v471, %v470
    %vm473 = vcmask 64512
    %v475 = vsel %vm473, %v456, 0
    %v478 = vsel %vm473, %v472, 0
    %480 = vmatpush.bf16.xpose.msra.mxu0 0
    %481 = vmatpush.bf16.xpose.msra.mxu0 0
    %482 = vmatpush.bf16.xpose.msra.mxu0 0
    %483 = vmatpush.bf16.xpose.msra.mxu0 0
    %484 = vmatpush.bf16.xpose.msra.mxu0 0
    %485 = vmatpush.bf16.xpose.msra.mxu0 0
    %486 = vmatpush.bf16.xpose.msra.mxu0 0
    %487 = vmatpush.bf16.xpose.msra.mxu0 %v478
    %488 = vmatmul.bf16.gmra.mxu0 %v475
    %v489 = vpop.f32.mrf.mxu0
    %v490 = vadd.f32 0.0, %v489
    %v491 = vpop.f32.mrf.mxu0
    %492 = vdwg.mxu0
    %v495 = vunpack.c.l.b16 %v462
    %v496 = vunpack.c.l.b16 %v463
    %v497 = vpack.c.b16 %v496, %v495
    %v499 = vsel %vm473, %v457, 0
    %v502 = vsel %vm473, %v497, 0
    %504 = vmatpush.bf16.xpose.msra.mxu0 0
    %505 = vmatpush.bf16.xpose.msra.mxu0 0
    %506 = vmatpush.bf16.xpose.msra.mxu0 0
    %507 = vmatpush.bf16.xpose.msra.mxu0 0
    %508 = vmatpush.bf16.xpose.msra.mxu0 0
    %509 = vmatpush.bf16.xpose.msra.mxu0 0
    %510 = vmatpush.bf16.xpose.msra.mxu0 0
    %511 = vmatpush.bf16.xpose.msra.mxu0 %v502
    %512 = vmatmul.bf16.gmra.mxu0 %v499
    %v513 = vpop.f32.mrf.mxu0
    %v514 = vadd.f32 0.0, %v513
    %v515 = vpop.f32.mrf.mxu0
    %516 = vdwg.mxu0
    %v519 = vunpack.c.l.b16 %v464
    %v520 = vunpack.c.l.b16 %v465
    %v521 = vpack.c.b16 %v520, %v519
    %v523 = vsel %vm473, %v458, 0
    %v526 = vsel %vm473, %v521, 0
    %528 = vmatpush.bf16.xpose.msra.mxu0 0
    %529 = vmatpush.bf16.xpose.msra.mxu0 0
    %530 = vmatpush.bf16.xpose.msra.mxu0 0
    %531 = vmatpush.bf16.xpose.msra.mxu0 0
    %532 = vmatpush.bf16.xpose.msra.mxu0 0
    %533 = vmatpush.bf16.xpose.msra.mxu0 0
    %534 = vmatpush.bf16.xpose.msra.mxu0 0
    %535 = vmatpush.bf16.xpose.msra.mxu0 %v526
    %536 = vmatmul.bf16.gmra.mxu0 %v523
    %v537 = vpop.f32.mrf.mxu0
    %v538 = vadd.f32 0.0, %v537
    %v539 = vpop.f32.mrf.mxu0
    %540 = vdwg.mxu0
    %v543 = vunpack.c.l.b16 %v466
    %v544 = vunpack.c.l.b16 %v467
    %v545 = vpack.c.b16 %v544, %v543
    %v547 = vsel %vm473, %v459, 0
    %v550 = vsel %vm473, %v545, 0
    %552 = vmatpush.bf16.xpose.msra.mxu0 0
    %553 = vmatpush.bf16.xpose.msra.mxu0 0
    %554 = vmatpush.bf16.xpose.msra.mxu0 0
    %555 = vmatpush.bf16.xpose.msra.mxu0 0
    %556 = vmatpush.bf16.xpose.msra.mxu0 0
    %557 = vmatpush.bf16.xpose.msra.mxu0 0
    %558 = vmatpush.bf16.xpose.msra.mxu0 0
    %559 = vmatpush.bf16.xpose.msra.mxu0 %v550
    %560 = vmatmul.bf16.gmra.mxu0 %v547
    %v561 = vpop.f32.mrf.mxu0
    %v562 = vadd.f32 0.0, %v561
    %v563 = vpop.f32.mrf.mxu0
    %564 = vdwg.mxu0
    %v565 = vmul.f32 %v490, 0.17677669
    %v566 = vmul.f32 %v514, 0.17677669
    %v567 = vmul.f32 %v538, 0.17677669
    %v568 = vmul.f32 %v562, 0.17677669
    %vm569 = vcmask 130048
    %v570 = vsel %vm569, %v565, -inf
    %571 = vmax.xlane.f32.xlu0 %v570
    %v572 = vpop.xlane.xlu0 %571
    %v573 = vsel %vm569, %v566, -inf
    %574 = vmax.xlane.f32.xlu0 %v573
    %v575 = vpop.xlane.xlu0 %574
    %v576 = vsel %vm569, %v567, -inf
    %577 = vmax.xlane.f32.xlu0 %v576
    %v578 = vpop.xlane.xlu0 %577
    %v579 = vsel %vm569, %v568, -inf
    %580 = vmax.xlane.f32.xlu0 %v579
    %v581 = vpop.xlane.xlu0 %580
    %v582 = vsub.f32 %v565, %v572
    %v583 = vsub.f32 %v566, %v575
    %v584 = vsub.f32 %v567, %v578
    %v585 = vsub.f32 %v568, %v581
    %v586 = vmul.f32 %v582, 1.442695
    %v587 = vpow.pop %v586
    %v588 = vmul.f32 %v583, 1.442695
    %v589 = vpow.pop %v588
    %v590 = vmul.f32 %v584, 1.442695
    %v591 = vpow.pop %v590
    %v592 = vmul.f32 %v585, 1.442695
    %v593 = vpow.pop %v592
    %v594 = vsel %vm569, %v587, 0.0
    %595 = vadd.xlane.f32.xlu0 %v594
    %v596 = vpop.xlane.xlu0 %595
    %v597 = vsel %vm569, %v589, 0.0
    %598 = vadd.xlane.f32.xlu0 %v597
    %v599 = vpop.xlane.xlu0 %598
    %v600 = vsel %vm569, %v591, 0.0
    %601 = vadd.xlane.f32.xlu0 %v600
    %v602 = vpop.xlane.xlu0 %601
    %v603 = vsel %vm569, %v593, 0.0
    %604 = vadd.xlane.f32.xlu0 %v603
    %v605 = vpop.xlane.xlu0 %604
    %v606 = vrcp.pop %v596
    %v607 = vrcp.pop %v599
    %v608 = vrcp.pop %v602
    %v609 = vrcp.pop %v605
    %v610 = vmul.f32 %v587, %v606
    %v611 = vmul.f32 %v589, %v607
    %v612 = vmul.f32 %v591, %v608
    %v613 = vmul.f32 %v593, %v609
    %v614 = vld [vmem:[%s9] sm:$0xff]
    %v615 = vld [vmem:[%s9 + $0x8] sm:$0xff]
    %v616 = vld [vmem:[%s9 + $0x10] sm:$0xff]
    %v617 = vld [vmem:[%s9 + $0x18] sm:$0xff]
    %v618 = vmul.f32 %v610, %v614
    %v619 = vmul.f32 %v611, %v615
    %v620 = vmul.f32 %v612, %v616
    %v621 = vmul.f32 %v613, %v617
    %v622 = vpack.c.bf16 %v618, %v618
    %v623 = vpack.c.bf16 %v619, %v619
    %v624 = vpack.c.bf16 %v620, %v620
    %v625 = vpack.c.bf16 %v621, %v621
    %v626 = vpack.c.bf16 %v374, %v374
    %v627 = vpack.c.bf16 %v376, %v376
    %v628 = vpack.c.bf16 %v400, %v400
    %v629 = vpack.c.bf16 %v402, %v402
    %v630 = vpack.c.bf16 %v426, %v426
    %v631 = vpack.c.bf16 %v428, %v428
    %v632 = vpack.c.bf16 %v452, %v452
    %v633 = vpack.c.bf16 %v454, %v454
    %v636 = vunpack.c.l.b16 %v626
    %v637 = vunpack.c.l.b16 %v627
    %v638 = vpack.c.b16 %v637, %v636
    %v641 = vsel %vm569, %v622, 0
    %643 = vmatpush.bf16.msra.mxu0 0
    %644 = vmatpush.bf16.msra.mxu0 0
    %645 = vmatpush.bf16.msra.mxu0 0
    %646 = vmatpush.bf16.msra.mxu0 0
    %647 = vmatpush.bf16.msra.mxu0 0
    %648 = vmatpush.bf16.msra.mxu0 0
    %649 = vmatpush.bf16.msra.mxu0 0
    %650 = vmatpush.bf16.msra.mxu0 %v638
    %651 = vmatmul.bf16.gmra.mxu0 %v641
    %v652 = vpop.f32.mrf.mxu0
    %v653 = vadd.f32 0.0, %v652
    %v654 = vpop.f32.mrf.mxu0
    %655 = vdwg.mxu0
    %v658 = vunpack.c.l.b16 %v628
    %v659 = vunpack.c.l.b16 %v629
    %v660 = vpack.c.b16 %v659, %v658
    %v663 = vsel %vm569, %v623, 0
    %665 = vmatpush.bf16.msra.mxu0 0
    %666 = vmatpush.bf16.msra.mxu0 0
    %667 = vmatpush.bf16.msra.mxu0 0
    %668 = vmatpush.bf16.msra.mxu0 0
    %669 = vmatpush.bf16.msra.mxu0 0
    %670 = vmatpush.bf16.msra.mxu0 0
    %671 = vmatpush.bf16.msra.mxu0 0
    %672 = vmatpush.bf16.msra.mxu0 %v660
    %673 = vmatmul.bf16.gmra.mxu0 %v663
    %v674 = vpop.f32.mrf.mxu0
    %v675 = vadd.f32 0.0, %v674
    %v676 = vpop.f32.mrf.mxu0
    %677 = vdwg.mxu0
    %v680 = vunpack.c.l.b16 %v630
    %v681 = vunpack.c.l.b16 %v631
    %v682 = vpack.c.b16 %v681, %v680
    %v685 = vsel %vm569, %v624, 0
    %687 = vmatpush.bf16.msra.mxu0 0
    %688 = vmatpush.bf16.msra.mxu0 0
    %689 = vmatpush.bf16.msra.mxu0 0
    %690 = vmatpush.bf16.msra.mxu0 0
    %691 = vmatpush.bf16.msra.mxu0 0
    %692 = vmatpush.bf16.msra.mxu0 0
    %693 = vmatpush.bf16.msra.mxu0 0
    %694 = vmatpush.bf16.msra.mxu0 %v682
    %695 = vmatmul.bf16.gmra.mxu0 %v685
    %v696 = vpop.f32.mrf.mxu0
    %v697 = vadd.f32 0.0, %v696
    %v698 = vpop.f32.mrf.mxu0
    %699 = vdwg.mxu0
    %v702 = vunpack.c.l.b16 %v632
    %v703 = vunpack.c.l.b16 %v633
    %v704 = vpack.c.b16 %v703, %v702
    %v707 = vsel %vm569, %v625, 0
    %709 = vmatpush.bf16.msra.mxu0 0
    %710 = vmatpush.bf16.msra.mxu0 0
    %711 = vmatpush.bf16.msra.mxu0 0
    %712 = vmatpush.bf16.msra.mxu0 0
    %713 = vmatpush.bf16.msra.mxu0 0
    %714 = vmatpush.bf16.msra.mxu0 0
    %715 = vmatpush.bf16.msra.mxu0 0
    %716 = vmatpush.bf16.msra.mxu0 %v704
    %717 = vmatmul.bf16.gmra.mxu0 %v707
    %v718 = vpop.f32.mrf.mxu0
    %v719 = vadd.f32 0.0, %v718
    %v720 = vpop.f32.mrf.mxu0
    %721 = vdwg.mxu0
    %v722 = vpack.c.bf16 %v653, %v653
    %v723 = vpack.c.bf16 %v675, %v675
    %v724 = vpack.c.bf16 %v697, %v697
    %v725 = vpack.c.bf16 %v719, %v719
    %v726 = vld [vmem:[%s4] sm:$0xf]
    %v727 = vld [vmem:[%s4 + $0x4] sm:$0xf]
    %v728 = vld [vmem:[%s4 + $0x8] sm:$0xf]
    %v729 = vld [vmem:[%s4 + $0xc] sm:$0xf]
    %v731 = vsel %vm473, %v722, 0
    %vm733 = vcmask 1043456
    %v735 = vsel %vm733, %v726, 0
    %737 = vmatpush.bf16.msra.mxu0 0
    %738 = vmatpush.bf16.msra.mxu0 0
    %739 = vmatpush.bf16.msra.mxu0 0
    %740 = vmatpush.bf16.msra.mxu0 0
    %741 = vmatpush.bf16.msra.mxu0 0
    %742 = vmatpush.bf16.msra.mxu0 0
    %743 = vmatpush.bf16.msra.mxu0 0
    %744 = vmatpush.bf16.msra.mxu0 %v735
    %745 = vmatmul.bf16.gmra.mxu0 %v731
    %v746 = vpop.f32.mrf.mxu0
    %v747 = vadd.f32 0.0, %v746
    %v748 = vpop.f32.mrf.mxu0
    %749 = vdwg.mxu0
    %v751 = vsel %vm473, %v723, 0
    %v754 = vsel %vm733, %v727, 0
    %756 = vmatpush.bf16.msra.mxu0 0
    %757 = vmatpush.bf16.msra.mxu0 0
    %758 = vmatpush.bf16.msra.mxu0 0
    %759 = vmatpush.bf16.msra.mxu0 0
    %760 = vmatpush.bf16.msra.mxu0 0
    %761 = vmatpush.bf16.msra.mxu0 0
    %762 = vmatpush.bf16.msra.mxu0 0
    %763 = vmatpush.bf16.msra.mxu0 %v754
    %764 = vmatmul.bf16.gmra.mxu0 %v751
    %v765 = vpop.f32.mrf.mxu0
    %v766 = vadd.f32 0.0, %v765
    %v767 = vpop.f32.mrf.mxu0
    %768 = vdwg.mxu0
    %v770 = vsel %vm473, %v724, 0
    %v773 = vsel %vm733, %v728, 0
    %775 = vmatpush.bf16.msra.mxu0 0
    %776 = vmatpush.bf16.msra.mxu0 0
    %777 = vmatpush.bf16.msra.mxu0 0
    %778 = vmatpush.bf16.msra.mxu0 0
    %779 = vmatpush.bf16.msra.mxu0 0
    %780 = vmatpush.bf16.msra.mxu0 0
    %781 = vmatpush.bf16.msra.mxu0 0
    %782 = vmatpush.bf16.msra.mxu0 %v773
    %783 = vmatmul.bf16.gmra.mxu0 %v770
    %v784 = vpop.f32.mrf.mxu0
    %v785 = vadd.f32 0.0, %v784
    %v786 = vpop.f32.mrf.mxu0
    %787 = vdwg.mxu0
    %v789 = vsel %vm473, %v725, 0
    %v792 = vsel %vm733, %v729, 0
    %794 = vmatpush.bf16.msra.mxu0 0
    %795 = vmatpush.bf16.msra.mxu0 0
    %796 = vmatpush.bf16.msra.mxu0 0
    %797 = vmatpush.bf16.msra.mxu0 0
    %798 = vmatpush.bf16.msra.mxu0 0
    %799 = vmatpush.bf16.msra.mxu0 0
    %800 = vmatpush.bf16.msra.mxu0 0
    %801 = vmatpush.bf16.msra.mxu0 %v792
    %802 = vmatmul.bf16.gmra.mxu0 %v789
    %v803 = vpop.f32.mrf.mxu0
    %v804 = vadd.f32 0.0, %v803
    %v805 = vpop.f32.mrf.mxu0
    %806 = vdwg.mxu0
    %v807 = vsel %vm116, %v747, 0.0
    %v808 = vsel %vm116, %v766, 0.0
    %v809 = vadd.f32 %v807, %v808
    %v810 = vsel %vm116, %v785, 0.0
    %v811 = vadd.f32 %v809, %v810
    %v812 = vsel %vm116, %v804, 0.0
    %v813 = vadd.f32 %v811, %v812
    %v814 = vadd.f32 %v85, %v813
    %v815 = vsel %vm116, %v814, 0.0
    %816 = vadd.xlane.f32.xlu0 %v815
    %v817 = vpop.xlane.xlu0 %816
    %v818 = vrcp.pop 32.0
    %v819 = vmul.f32 32.0, %v818
    %v820 = vsub.f32 1.0, %v819
    %v821 = vmul.f32 %v818, %v820
    %v822 = vadd.f32 %v818, %v821
    %vm823 = vweird.f32 %v818
    %v824 = vsel %vm823, %v818, %v822
    %v825 = vmul.f32 %v817, %v824
    %v826 = vsub.f32 %v814, %v825
    %v827 = vmul.f32 %v826, %v826
    %v828 = vsel %vm116, %v827, 0.0
    %829 = vadd.xlane.f32.xlu0 %v828
    %v830 = vpop.xlane.xlu0 %829
    %v831 = vmul.f32 %v830, %v824
    %v832 = vadd.f32 %v831, 1e-05
    %v833 = vrsqrt.pop %v832
    %v834 = vmul.f32 %v833, %v832
    %v835 = vmul.f32 %v834, %v833
    %v836 = vmul.f32 0.5, %v835
    %v837 = vsub.f32 1.5, %v836
    %v838 = vmul.f32 %v833, %v837
    %vm839 = vweird.f32 %v832
    %vm840 = vweird.f32 %v833
    %vm841 = vmor %vm839, %vm840
    %v842 = vsel %vm841, %v833, %v838
    %v843 = vmul.f32 %v826, %v842
    %v844 = vld [vmem:[%s7] sm:$0xff]
    %v845 = vmul.f32 %v843, %v844
    %s846 = scalar_lea.vmem %s7, 8
    %v847 = vld [vmem:[%s846] sm:$0xff]
    %v848 = vadd.f32 %v845, %v847
    %v849 = vpack.c.bf16 %v848, %v848
    %v850 = vld [vmem:[%s5] sm:$0xf]
    %v851 = vld [vmem:[%s5 + $0x4] sm:$0xf]
    %v852 = vld [vmem:[%s5 + $0x8] sm:$0xf]
    %v853 = vld [vmem:[%s5 + $0xc] sm:$0xf]
    %v854 = vld [vmem:[%s8] sm:$0xff]
    %v859 = vunpack.c.l.b16 %v850
    %v860 = vunpack.c.l.b16 %v851
    %v861 = vunpack.c.l.b16 %v852
    %v862 = vunpack.c.l.b16 %v853
    %v863 = vpack.c.b16 %v860, %v859
    %v864 = vpack.c.b16 %v862, %v861
    %v868 = vsel %vm116, %v849, 0
    %870 = vmatpush.bf16.msra.mxu0 0
    %871 = vmatpush.bf16.msra.mxu0 0
    %872 = vmatpush.bf16.msra.mxu0 0
    %873 = vmatpush.bf16.msra.mxu0 0
    %874 = vmatpush.bf16.msra.mxu0 0
    %875 = vmatpush.bf16.msra.mxu0 0
    %876 = vmatpush.bf16.msra.mxu0 %v864
    %877 = vmatpush.bf16.msra.mxu0 %v863
    %878 = vmatmul.bf16.gmra.mxu0 %v868
    %v879 = vpop.f32.mrf.mxu0
    %v880 = vadd.f32 %v854, %v879
    %v881 = vpop.f32.mrf.mxu0
    %882 = vdwg.mxu0
    %v883 = vmax.f32 %v880, 0.0
    %v884 = vpack.c.bf16 %v883, %v883
    %v885 = vld [vmem:[%s6] sm:$0xf]
    %v886 = vld [vmem:[%s6 + $0x4] sm:$0xf]
    %v887 = vld [vmem:[%s6 + $0x8] sm:$0xf]
    %v888 = vld [vmem:[%s6 + $0xc] sm:$0xf]
    %v889 = vld [vmem:[%s6 + $0x10] sm:$0xf]
    %v890 = vld [vmem:[%s6 + $0x14] sm:$0xf]
    %v891 = vld [vmem:[%s6 + $0x18] sm:$0xf]
    %v892 = vld [vmem:[%s6 + $0x1c] sm:$0xf]
    %s893 = scalar_lea.vmem %s7, 16
    %v894 = vld [vmem:[%s893] sm:$0xff]
    %v903 = vunpack.c.l.b16 %v885
    %v904 = vunpack.c.l.b16 %v886
    %v905 = vunpack.c.l.b16 %v887
    %v906 = vunpack.c.l.b16 %v888
    %v907 = vunpack.c.l.b16 %v889
    %v908 = vunpack.c.l.b16 %v890
    %v909 = vunpack.c.l.b16 %v891
    %v910 = vunpack.c.l.b16 %v892
    %v911 = vpack.c.b16 %v904, %v903
    %v912 = vpack.c.b16 %v906, %v905
    %v913 = vpack.c.b16 %v908, %v907
    %v914 = vpack.c.b16 %v910, %v909
    %vm919 = vcmask 523264
    %v921 = vsel %vm919, %v884, 0
    %923 = vmatpush.bf16.msra.mxu0 0
    %924 = vmatpush.bf16.msra.mxu0 0
    %925 = vmatpush.bf16.msra.mxu0 0
    %926 = vmatpush.bf16.msra.mxu0 0
    %927 = vmatpush.bf16.msra.mxu0 %v914
    %928 = vmatpush.bf16.msra.mxu0 %v913
    %929 = vmatpush.bf16.msra.mxu0 %v912
    %930 = vmatpush.bf16.msra.mxu0 %v911
    %931 = vmatmul.bf16.gmra.mxu0 %v921
    %v932 = vpop.f32.mrf.mxu0
    %v933 = vadd.f32 %v894, %v932
    %v934 = vpop.f32.mrf.mxu0
    %935 = vdwg.mxu0
    %v936 = vadd.f32 %v848, %v933
    %v937 = vsel %vm116, %v936, 0.0
    %938 = vadd.xlane.f32.xlu0 %v937
    %v939 = vpop.xlane.xlu0 %938
    %v940 = vmul.f32 %v939, %v824
    %v941 = vsub.f32 %v936, %v940
    %v942 = vmul.f32 %v941, %v941
    %v943 = vsel %vm116, %v942, 0.0
    %944 = vadd.xlane.f32.xlu0 %v943
    %v945 = vpop.xlane.xlu0 %944
    %v946 = vmul.f32 %v945, %v824
    %v947 = vadd.f32 %v946, 1e-05
    %v948 = vrsqrt.pop %v947
    %v949 = vmul.f32 %v948, %v947
    %v950 = vmul.f32 %v949, %v948
    %v951 = vmul.f32 0.5, %v950
    %v952 = vsub.f32 1.5, %v951
    %v953 = vmul.f32 %v948, %v952
    %vm954 = vweird.f32 %v947
    %vm955 = vweird.f32 %v948
    %vm956 = vmor %vm954, %vm955
    %v957 = vsel %vm956, %v948, %v953
    %v958 = vmul.f32 %v941, %v957
    %s959 = scalar_lea.vmem %s7, 24
    %v960 = vld [vmem:[%s959] sm:$0xff]
    %v961 = vmul.f32 %v958, %v960
    %s962 = scalar_lea.vmem %s7, 32
    %v963 = vld [vmem:[%s962] sm:$0xff]
    %v964 = vadd.f32 %v961, %v963
    %965 = vst.msk [vmem:[#allocation8] sm:$0xff] %vm116, %v964
    // Predicated region
    $region54: #{_lambda_.1} parent=1 // pred_check
      _
    $region55: #{_lambda_.1} parent=1 // pred_check_branch
      %967 = sbr.rel (0) target = $region57
    $region56: #{_lambda_.1} parent=1 // pred_region
      %969 = vsyncadd [#allocation4], 0
      %s971 = sshll.u32 [#allocation8], 4
      %s972 = int_to_ptr.vmem [resolvable:$true] %s971
      %s973 = sshll.u32 %s10, 4
      %s974 = int_to_ptr.hbm [resolvable:$true] %s973
      %976 = dma.vmem_to_hbm [thread:$0]  %s972, 128, %s974, [#allocation4]
    $region57: #{_lambda_.1} parent=1 // pred_fallthru
      _
    // Predicated region
    $region58: #{_lambda_.1} parent=1 // pred_check
      _
    $region59: #{_lambda_.1} parent=1 // pred_check_branch
      %978 = sbr.rel (0) target = $region61
    $region60: #{_lambda_.1} parent=1 // pred_region
      %980 = dma.done [#allocation4], 128
    $region61: #{_lambda_.1} parent=1 // pred_fallthru
      _
    %981 = vsyncpa [#allocation3], 1
    %982 = vsyncpa [#allocation6], 1
    %983 = vsyncpa [#allocation4], 1

</llo_original>
